<compile_context>
chip_gen: v6e
topology: v6e:2x2x1
jax: 0.10.0
libtpu: 0.0.40
codegen_flags: <defaults>
</compile_context>

<pallas_src>
import functools

import jax
import jax.numpy as jnp
from jax.experimental import pallas as pl
from jax.experimental.pallas import tpu as pltpu

LANE = 128
_WIDTHS = (2048, 1024, 512, 256, 128)


def _cdiv(a: int, b: int) -> int:
    return -(-a // b)


def _lipswish_kernel(beta_ref, x_ref, o_ref, *, compute_dtype):
    # beta_ref: SMEM scalar (shape (1,), f32); x_ref/o_ref: VMEM tiles.
    beta = beta_ref[0].astype(compute_dtype)
    x = x_ref[...].astype(compute_dtype)
    # sigmoid lowers to EUP exp + divide; the 1/1.1 scale is a weak-typed
    # python float, so it does NOT upcast bf16 math to f32.
    y = x * jax.nn.sigmoid(beta * x) * (1.0 / 1.1)
    o_ref[...] = y.astype(o_ref.dtype)


def _tpu_flavor():
    """Returns (new_gen, two_tc).

    new_gen: v6e/v7x-class chip (bf16 VPU/EUP, 32 MiB scoped-VMEM default).
    two_tc:  v7x-class chip (2 TensorCores per chip).
    Conservative (False, False) if detection fails.
    """
    try:
        kind = jax.devices()[0].device_kind.lower()
    except Exception:
        return False, False
    new_gen = any(t in kind for t in ("v6", "v7", "7x"))
    two_tc = any(t in kind for t in ("v7", "7x"))
    return new_gen, two_tc


def _pick_block_rows(rows, width, itemsize, target_bytes, min_steps):
    """Rows per block: near-even split of `rows`, sublane-packing aligned,
    ~target_bytes per buffer, and at least `min_steps` grid steps."""
    sub = max(8, 32 // itemsize)  # 8 for f32, 16 for bf16/f16, 32 for int8/fp8
    if rows <= sub:
        return rows  # full extent — always a legal block shape
    target_rows = max(sub, target_bytes // (width * itemsize))
    steps = max(min_steps, _cdiv(rows, target_rows))
    if min_steps >= 2 and steps % 2:
        steps += 1  # even step count keeps the 2-TC split balanced on v7x
    block_rows = _cdiv(rows, steps)
    block_rows = _cdiv(block_rows, sub) * sub  # round up to packing multiple
    return min(block_rows, rows)


def _run_2d(x2d, beta_f32, *, block_rows, compute_dtype, cost, parallel=True):
    rows, width = x2d.shape
    grid = (_cdiv(rows, block_rows),)
    kernel = functools.partial(_lipswish_kernel, compute_dtype=compute_dtype)
    return pl.pallas_call(
        kernel,
        out_shape=jax.ShapeDtypeStruct((rows, width), x2d.dtype),
        grid=grid,
        in_specs=[
            pl.BlockSpec(memory_space=pltpu.SMEM),                # beta scalar
            pl.BlockSpec((block_rows, width), lambda i: (i, 0)),  # x tile
        ],
        out_specs=pl.BlockSpec((block_rows, width), lambda i: (i, 0)),
        compiler_params=pltpu.CompilerParams(
            dimension_semantics=("parallel" if parallel else "arbitrary",)),
        cost_estimate=cost,
    )(beta_f32, x2d)


def lipswish(x: jax.Array, beta: jax.Array) -> jax.Array:
    """LipSwish forward. x: any shape (e.g. NCHW), beta: shape (1,) float32."""
    orig_shape = x.shape
    dtype = x.dtype
    itemsize = jnp.dtype(dtype).itemsize
    n = x.size

    new_gen, two_tc = _tpu_flavor()
    # Per-buffer block target; 2 in + 2 out pipelined buffers stay below the
    # scoped-VMEM defaults (16 MiB v5e, 32 MiB v6e/v7x) without an override.
    target_bytes = (6 << 20) if new_gen else (3 << 20)
    min_steps = 2 if two_tc else 1
    # Native bf16 math on v6e/v7x (bf16 VPU/EUP); f32 math elsewhere.
    compute_dtype = dtype if (new_gen and dtype == jnp.bfloat16) else jnp.float32

    beta_f32 = beta.reshape(-1).astype(jnp.float32)
    xf = x.reshape(-1)

    tail = n % LANE          # < 128 elements; zero in the common case
    bulk = n - tail          # always a multiple of 128

    outs = []
    if bulk:
        width = next(w for w in _WIDTHS if bulk % w == 0)
        rows = bulk // width
        block_rows = _pick_block_rows(rows, width, itemsize, target_bytes, min_steps)
        # Copy-free reshape when n is lane-divisible; otherwise only the bulk
        # prefix is sliced (the tail below is < 128 elements).
        x2d = (xf if not tail else xf[:bulk]).reshape(rows, width)
        cost = pl.CostEstimate(flops=4 * bulk, transcendentals=bulk,
                               bytes_accessed=2 * bulk * itemsize)
        out2d = _run_2d(x2d, beta_f32, block_rows=block_rows,
                        compute_dtype=compute_dtype, cost=cost, parallel=True)
        outs.append(out2d.reshape(-1))
    if tail:
        # Ragged remainder (< 128 elems): pad only the tail to one lane row.
        # LipSwish(0) == 0, padded region is discarded below.
        x_tail = jnp.pad(xf[bulk:], (0, LANE - tail)).reshape(1, LANE)
        out_tail = _run_2d(x_tail, beta_f32, block_rows=1,
                           compute_dtype=compute_dtype, cost=None, parallel=False)
        outs.append(out_tail.reshape(-1)[:tail])

    out = outs[0] if len(outs) == 1 else jnp.concatenate(outs)
    return out.reshape(orig_shape)


if __name__ == "__main__":
    key = jax.random.PRNGKey(0)
    # NCHW input, as PyTorch would see it.
    x = jax.random.normal(key, (2, 4, 16, 16), dtype=jnp.float32)
    # Deterministic parameter init: beta = ones([1]) (matches nn.Parameter(torch.ones([1]))).
    beta = jnp.ones((1,), dtype=jnp.float32)

    y = jax.block_until_ready(lipswish(x, beta))
    y_ref = x * jax.nn.sigmoid(beta * x) / 1.1
    assert y.shape == x.shape and y.dtype == x.dtype
    assert jnp.allclose(y, y_ref, atol=1e-6, rtol=1e-6)

    # Ragged element count (1155 = 9*128 + 3): exercises the bulk + tiny-tail path.
    x2 = jax.random.normal(jax.random.PRNGKey(1), (3, 5, 7, 11), dtype=jnp.float32)
    y2 = jax.block_until_ready(lipswish(x2, beta))
    y2_ref = x2 * jax.nn.sigmoid(beta * x2) / 1.1
    assert y2.shape == x2.shape and jnp.allclose(y2, y2_ref, atol=1e-6, rtol=1e-6)

    # bf16 input: exercises the native-low-precision path on v6e/v7x
    # (falls back to f32 compute on v5-class chips).
    x3 = jax.random.normal(jax.random.PRNGKey(2), (2, 4, 16, 16), dtype=jnp.bfloat16)
    y3 = jax.block_until_ready(lipswish(x3, beta))
    x3f = x3.astype(jnp.float32)
    y3_ref = x3f * jax.nn.sigmoid(beta * x3f) / 1.1
    assert y3.shape == x3.shape and y3.dtype == x3.dtype
    assert jnp.allclose(y3.astype(jnp.float32), y3_ref, atol=2e-2, rtol=5e-2)

    print("KERNEL_OK")
</pallas_src>

<mosaic_0001>
module attributes {stable_mosaic.version = 11 : i64} {
  func.func @_lipswish_kernel(%arg0: i32, %arg1: memref<1xf32, #tpu.memory_space<smem>>, %arg2: memref<1x2048xf32, #tpu.memory_space<vmem>>, %arg3: memref<1x2048xf32, #tpu.memory_space<vmem>>) attributes {dimension_semantics = [#tpu.dimension_semantics<parallel>], iteration_bounds = array<i64: 1>, scalar_prefetch = 0 : i64, scratch_operands = 0 : i64, tpu.core_type = #tpu.core_type<tc>, window_params = [{transform_indices = @transform_0, window_bounds = array<i64: 1>}, {transform_indices = @transform_1, window_bounds = array<i64: 1, 2048>}, {transform_indices = @transform_2, window_bounds = array<i64: 1, 2048>}]} {
    %c0 = arith.constant 0 : index
    %0 = memref.load %arg1[%c0] : memref<1xf32, #tpu.memory_space<smem>>
    %c0_0 = arith.constant 0 : index
    %c0_1 = arith.constant 0 : index
    %1 = vector.load %arg2[%c0_0, %c0_1] : memref<1x2048xf32, #tpu.memory_space<vmem>>, vector<1x2048xf32>
    %2 = vector.broadcast %0 : f32 to vector<1x2048xf32>
    %3 = arith.mulf %2, %1 : vector<1x2048xf32>
    %4 = arith.negf %3 : vector<1x2048xf32>
    %5 = math.exp %4 : vector<1x2048xf32>
    %cst = arith.constant 1.000000e+00 : f32
    %6 = vector.broadcast %cst : f32 to vector<1x2048xf32>
    %7 = arith.addf %6, %5 : vector<1x2048xf32>
    %8 = arith.divf %6, %7 : vector<1x2048xf32>
    %9 = arith.mulf %1, %8 : vector<1x2048xf32>
    %cst_2 = arith.constant 0.909090936 : f32
    %10 = vector.broadcast %cst_2 : f32 to vector<1x2048xf32>
    %11 = arith.mulf %9, %10 : vector<1x2048xf32>
    %c0_3 = arith.constant 0 : index
    %c0_4 = arith.constant 0 : index
    %12 = vector.load %arg3[%c0_3, %c0_4] : memref<1x2048xf32, #tpu.memory_space<vmem>>, vector<1x2048xf32>
    tpu.vector_store %arg3[%c0_3, %c0_4], %11 {strides = array<i32>} : memref<1x2048xf32, #tpu.memory_space<vmem>>, vector<1x2048xf32>,
    return
  }
  func.func @transform_0(%arg0: i32) -> i32 {
    %c0_i32 = arith.constant 0 : i32
    %c0_i32_0 = arith.constant 0 : i32
    return %c0_i32 : i32
  }
  func.func @transform_1(%arg0: i32) -> (i32, i32) {
    %c0_i32 = arith.constant 0 : i32
    %c0_i32_0 = arith.constant 0 : i32
    return %arg0, %c0_i32 : i32, i32
  }
  func.func @transform_2(%arg0: i32) -> (i32, i32) {
    %c0_i32 = arith.constant 0 : i32
    %c0_i32_0 = arith.constant 0 : i32
    return %arg0, %c0_i32 : i32, i32
  }
}

</mosaic_0001>

<llo_original>
// kernel: tpu_custom_call.1
$region0: #{tpu_custom_call.1}
  #allocation0 [shape = 'u32[]', space=smem, size = 0x4, offset = 0x4, fixed_abs, tag = 'smem constant byte address 0x4 - core index']
  #allocation1 [shape = 'u32[144,128]{1,0:T(1,128)}', space=vmem, size = 0x12000, scoped, tag = 'internal scratch']
  #allocation2 [shape = 'f32[1]{0:T(128)S(6)}', space=smem, size = 0x200, scoped, tag = 'scoped memory for tpu_custom_call.1']
  %s0 = inlined_call_operand.<no memory space> [shape: f32[1], index: 0, kind: input, shape index: {}]
  %s1 = inlined_call_operand.hbm [shape: f32[1,2048], index: 1, kind: input, shape index: {}]
  %s2 = inlined_call_operand.hbm [shape: f32[1,2048], index: 2, kind: output, shape index: {}]
  %s3 = sld [smem:[#allocation0]]
  $region22: #{tpu_custom_call.1} parent=0
    _
  %s5 = ssub.s32 1, %s3
  %s6 = scalar_select 0, %s5, %s3
  %7 = sst [smem:[#allocation2]] %s0
  $region1: #{tpu_custom_call.1} parent=0
    #allocation3 [shape = 'u8[8192]{0}', space=vmem, size = 0x2000, scoped, tag = 'input window, operand 1, single buffered']
    #allocation4 [shape = 's32[1]{0}', space=sflag, size = 0x4, scoped, tag = 'scoped memory for tpu_custom_call.1']
    #allocation5 [shape = 's32[1]{0}', space=sflag, size = 0x4, scoped, tag = 'scoped memory for tpu_custom_call.1']
    #allocation6 [shape = 'u8[8192]{0}', space=vmem, size = 0x2000, scoped, tag = 'output window, operand 0, single buffered']
    %8 = vsyncpa [#allocation4], 0
    %9 = vsyncpa [#allocation5], 0
    // Predicated region
    $region2: #{tpu_custom_call.1} parent=1 // pred_check
      _
    $region3: #{tpu_custom_call.1} parent=1 // pred_check_branch
      %11 = sbr.rel (0) target = $region5
    $region4: #{tpu_custom_call.1} parent=1 // pred_region
      _
    $region5: #{tpu_custom_call.1} parent=1 // pred_fallthru
      _
    // Predicated region
    $region6: #{tpu_custom_call.1} parent=1 // pred_check
      _
    $region7: #{tpu_custom_call.1} parent=1 // pred_check_branch
      %13 = sbr.rel (0) target = $region9
    $region8: #{tpu_custom_call.1} parent=1 // pred_region
      %s15 = ssub.s32 256, 256
      %16 = vsyncadd [#allocation4], %s15
      %s18 = sshll.u32 [#allocation3], 4
      %s19 = int_to_ptr.vmem [resolvable:$true] %s18
      %21 = dma.hbm_to_vmem [thread:$0]  %s1, 256, %s19, [#allocation4]
    $region9: #{tpu_custom_call.1} parent=1 // pred_fallthru
      _
    // Predicated region
    $region10: #{tpu_custom_call.1} parent=1 // pred_check
      _
    $region11: #{tpu_custom_call.1} parent=1 // pred_check_branch
      %23 = sbr.rel (0) target = $region13
    $region12: #{tpu_custom_call.1} parent=1 // pred_region
      %24 = dma.done [#allocation4], 256
    $region13: #{tpu_custom_call.1} parent=1 // pred_fallthru
      _
    %s25 = sld [smem:[#allocation2]]
    %v26 = vld [vmem:[#allocation3] sm:$0xff]
    %v27 = vld [vmem:[#allocation3 + $0x8] sm:$0xff]
    %v28 = vstv %s25
    %v29 = vmul.f32 %v28, %v26
    %v30 = vmul.f32 %v28, %v27
    %v31 = vxor.u32 %v29, 2147483648
    %v32 = vxor.u32 %v30, 2147483648
    %v33 = vmul.f32 %v31, 1.442695
    %v34 = vpow.pop %v33
    %v35 = vmul.f32 %v32, 1.442695
    %v36 = vpow.pop %v35
    %v37 = vadd.f32 %v34, 1.0
    %v38 = vadd.f32 %v36, 1.0
    %v39 = vrcp.pop %v37
    %v40 = vmul.f32 1.0, %v39
    %v41 = vrcp.pop %v38
    %v42 = vmul.f32 1.0, %v41
    %v43 = vmul.f32 %v26, %v40
    %v44 = vmul.f32 %v27, %v42
    %v45 = vmul.f32 %v43, 0.90909094
    %v46 = vmul.f32 %v44, 0.90909094
    %47 = vst [vmem:[#allocation6] sm:$0xff] %v45
    %48 = vst [vmem:[#allocation6 + $0x8] sm:$0xff] %v46
    // Predicated region
    $region14: #{tpu_custom_call.1} parent=1 // pred_check
      _
    $region15: #{tpu_custom_call.1} parent=1 // pred_check_branch
      %50 = sbr.rel (0) target = $region17
    $region16: #{tpu_custom_call.1} parent=1 // pred_region
      %s52 = ssub.s32 256, 256
      %53 = vsyncadd [#allocation5], %s52
      %s55 = sshll.u32 [#allocation6], 4
      %s56 = int_to_ptr.vmem [resolvable:$true] %s55
      %58 = dma.vmem_to_hbm [thread:$0]  %s56, 256, %s2, [#allocation5]
    $region17: #{tpu_custom_call.1} parent=1 // pred_fallthru
      _
    // Predicated region
    $region18: #{tpu_custom_call.1} parent=1 // pred_check
      _
    $region19: #{tpu_custom_call.1} parent=1 // pred_check_branch
      %60 = sbr.rel (0) target = $region21
    $region20: #{tpu_custom_call.1} parent=1 // pred_region
      %61 = dma.done [#allocation5], 256
    $region21: #{tpu_custom_call.1} parent=1 // pred_fallthru
      _
    %62 = vsyncpa [#allocation4], 1
    %63 = vsyncpa [#allocation5], 1

</llo_original>
